<compile_context>
chip_gen: v5e
topology: v5e:2x2
jax: 0.10.0
libtpu: 0.0.40
codegen_flags: <defaults>
</compile_context>

<pallas_src>
import jax
import jax.numpy as jnp
from jax.experimental import pallas as pl
from jax.experimental.pallas import tpu as pltpu

LANE = 128


def _round_up(x: int, m: int) -> int:
    return (x + m - 1) // m * m


def _vmem_capacity_bytes() -> int:
    """Physical VMEM (v5e/v6e: 128 MiB, v7x: 64 MiB); conservative fallback."""
    try:
        return int(pltpu.get_tpu_info().vmem_capacity_bytes)
    except Exception:
        return 64 << 20


def _hid_tile_candidates(hid_p: int):
    """Multiples of 128 that divide hid_p, descending (valid K-tile widths)."""
    m = hid_p // LANE
    return sorted((LANE * d for d in range(1, m + 1) if m % d == 0), reverse=True)


def _choose_batch_tile(batch: int, sublane: int, cap: int):
    """Pick a batch tile balancing padded-row waste vs. per-step overhead
    (~0.35 us/step ~= a few tens of rows of mem-bound work)."""
    b_s = _round_up(batch, sublane)
    cap = max(sublane, cap // sublane * sublane)
    best_tb, best_score = sublane, None
    for tb in range(sublane, min(cap, b_s) + 1, sublane):
        b_pad = _round_up(b_s, tb)
        score = (b_pad - b_s) + 32 * (b_pad // tb)
        if (best_score is None or score < best_score
                or (score == best_score and tb > best_tb)):
            best_tb, best_score = tb, score
    return best_tb, _round_up(b_s, best_tb)


def mlp_kernel(x_ref, w1_ref, b1_ref, w2_ref, b2_ref, o_ref, acc_ref):
    """One (batch-tile i, hid-tile k) step of out = relu(x@w1+b1) @ w2 + b2."""
    k = pl.program_id(1)

    @pl.when(k == 0)
    def _():
        acc_ref[...] = jnp.zeros_like(acc_ref)

    # First linear on the MXU with an f32 accumulator; bias + ReLU stay f32.
    # (Default MXU precision; pass would need Precision.HIGHEST only for
    #  bit-level f32 parity.)
    h = jnp.dot(x_ref[...], w1_ref[...], preferred_element_type=jnp.float32)
    h = jnp.maximum(h + b1_ref[...], 0.0)
    # Dropout(p=0) / eval mode is the identity.
    # TODO(synk): training-mode dropout (p>0) would need pltpu.prng_* masking.
    h = h.astype(w2_ref.dtype)  # single cast before the second MXU pass
    acc_ref[...] += jnp.dot(h, w2_ref[...], preferred_element_type=jnp.float32)

    @pl.when(k == pl.num_programs(1) - 1)
    def _():
        o_ref[...] = (acc_ref[...] + b2_ref[...]).astype(o_ref.dtype)


def prepare_params(w1, b1, w2, b2, compute_dtype=None):
    """Zero-pad weights/biases to lane-dense (128-multiple) shapes ONCE.

    Call at init time, not per forward call: the padding copies are an extra
    HBM pass that would otherwise be paid on every invocation.  Biases stay
    f32 (they are added to the f32 accumulator in the epilogue).
    """
    inp_dim, hid_dim = w1.shape
    out_dim = w2.shape[1]
    wdt = jnp.dtype(compute_dtype) if compute_dtype is not None else w1.dtype
    inp_p, hid_p, out_p = (_round_up(d, LANE) for d in (inp_dim, hid_dim, out_dim))
    w1p = jnp.zeros((inp_p, hid_p), wdt).at[:inp_dim, :hid_dim].set(w1.astype(wdt))
    w2p = jnp.zeros((hid_p, out_p), wdt).at[:hid_dim, :out_dim].set(w2.astype(wdt))
    b1p = jnp.zeros((1, hid_p), jnp.float32).at[0, :hid_dim].set(b1.astype(jnp.float32))
    b2p = jnp.zeros((1, out_p), jnp.float32).at[0, :out_dim].set(b2.astype(jnp.float32))
    return (w1p, b1p, w2p, b2p), (inp_dim, hid_dim, out_dim)


def simple_mlp_padded(x, padded_params, dims, *, max_block_b=None,
                      max_hid_tile=None, ensure_two_grid_steps=True):
    """Fused MLP forward on pre-padded parameters.

    x: [B, inp_dim]; padded_params from prepare_params(); returns [B, out_dim].
    """
    w1p, b1p, w2p, b2p = padded_params
    inp_dim, hid_dim, out_dim = dims
    B = x.shape[0]
    assert x.shape[1] == inp_dim

    out_dtype = x.dtype
    cdt = w1p.dtype                       # compute dtype for the MXU passes
    x_isz = jnp.dtype(cdt).itemsize
    w_isz = jnp.dtype(cdt).itemsize
    o_isz = jnp.dtype(out_dtype).itemsize
    b_isz = 4

    inp_p, hid_p = w1p.shape
    out_p = w2p.shape[1]

    vmem_cap = _vmem_capacity_bytes()
    # Leave Mosaic internal-scratch headroom: ~52 MiB ceiling on v7x (64 MiB),
    # ~102 MiB on v5e/v6e (128 MiB).
    vmem_ceil = vmem_cap - max(12 << 20, vmem_cap // 5)

    # ---- batch-tile geometry -------------------------------------------
    sublane = max(8, 32 // x_isz)          # packed sublanes: 8 f32 / 16 bf16
    if max_block_b is None:
        max_block_b = 512 if vmem_cap >= (96 << 20) else 256
    tb, b_pad = _choose_batch_tile(B, sublane, max_block_b)

    # v7x has 2 TensorCores; make sure the "parallel" batch axis has >= 2
    # steps so both cores get work (negligible cost on single-TC chips).
    if ensure_two_grid_steps and b_pad // tb < 2:
        b_s = _round_up(B, sublane)
        if b_s >= 2 * sublane:
            tb = max(sublane, _round_up((b_s + 1) // 2, sublane))
            b_pad = _round_up(b_s, tb)

    # ---- hidden-dim (K) tiling ------------------------------------------
    cands = _hid_tile_candidates(hid_p)
    if max_hid_tile is not None:
        filt = [c for c in cands if c <= max_hid_tile]
        cands = filt if filt else [cands[-1]]
    thid = cands[0]

    def vmem_bytes(tb_, th_):
        # Pallas allocates 2 buffers per operand even when the index_map is
        # grid-invariant, so count everything at 2x.
        x_b = 2 * tb_ * inp_p * x_isz
        w_b = 2 * (inp_p * th_ + th_ * out_p) * w_isz
        bias_b = 2 * (th_ + out_p) * b_isz
        out_b = 2 * tb_ * out_p * o_isz
        acc_b = tb_ * out_p * 4
        interm = tb_ * th_ * (4 + w_isz) + tb_ * out_p * 4
        return x_b + w_b + bias_b + out_b + acc_b + interm

    def fits(tb_, th_):
        return vmem_bytes(tb_, th_) <= vmem_ceil

    # Phase 1: shrink the batch tile down to a 128-row floor (weights stay
    # VMEM-resident -- cheapest option).
    tb_floor = min(tb, max(sublane, 128))
    while not fits(tb, thid) and tb > tb_floor:
        tb = max(tb_floor, _round_up(tb // 2, sublane))
    # Phase 2: tile the hidden dim (weights streamed across the k axis).
    while not fits(tb, thid):
        smaller = [c for c in cands if c < thid]
        if not smaller:
            break
        thid = smaller[0]
    # Phase 3: last resort, shrink the batch tile toward the sublane minimum.
    while not fits(tb, thid) and tb > sublane:
        tb = max(sublane, _round_up(tb // 2, sublane))
    # TODO(synk): if a single [inp_p, thid] weight slice still exceeds VMEM
    # (huge inp_dim), add an inp-dim grid axis with its own accumulator.

    b_pad = _round_up(_round_up(B, sublane), tb)
    n_b = b_pad // tb
    n_k = hid_p // thid

    # ---- input padding (skipped when already aligned) --------------------
    if (b_pad != B) or (inp_p != inp_dim):
        xp = jnp.zeros((b_pad, inp_p), cdt).at[:B, :inp_dim].set(x.astype(cdt))
    else:
        xp = x.astype(cdt)

    weight_bytes = (inp_p * hid_p + hid_p * out_p) * w_isz
    cost = pl.CostEstimate(
        flops=int(2 * b_pad * (inp_p * hid_p + hid_p * out_p)),
        transcendentals=0,
        bytes_accessed=int(b_pad * inp_p * x_isz
                           + weight_bytes * (n_b if n_k > 1 else 1)
                           + (hid_p + out_p) * b_isz
                           + b_pad * out_p * o_isz),
    )

    vmem_limit = int(max(32 << 20,
                         min(vmem_bytes(tb, thid) + (8 << 20),
                             vmem_cap - (2 << 20))))

    out_padded = pl.pallas_call(
        mlp_kernel,
        out_shape=jax.ShapeDtypeStruct((b_pad, out_p), out_dtype),
        grid=(n_b, n_k),
        in_specs=[
            # x: tiled along the batch axis, invariant in k (DMA'd once per i).
            pl.BlockSpec((tb, inp_p), lambda i, k: (i, 0)),
            # Weights / biases: invariant in i; move only along k (resident
            # when n_k == 1, streamed otherwise).
            pl.BlockSpec((inp_p, thid), lambda i, k: (0, k)),
            pl.BlockSpec((1, thid), lambda i, k: (0, k)),
            pl.BlockSpec((thid, out_p), lambda i, k: (k, 0)),
            pl.BlockSpec((1, out_p), lambda i, k: (0, 0)),
        ],
        out_specs=pl.BlockSpec((tb, out_p), lambda i, k: (i, 0)),
        scratch_shapes=[pltpu.VMEM((tb, out_p), jnp.float32)],
        compiler_params=pltpu.CompilerParams(
            dimension_semantics=("parallel", "arbitrary"),
            vmem_limit_bytes=vmem_limit,
        ),
        cost_estimate=cost,
    )(xp, w1p, b1p, w2p, b2p)

    if (b_pad != B) or (out_p != out_dim):
        return out_padded[:B, :out_dim]
    return out_padded


def simple_mlp(x, w1, b1, w2, b2, *, compute_dtype=None, **kwargs):
    """Convenience one-shot entry (pads weights per call).  Prefer
    prepare_params() + simple_mlp_padded() so padding is hoisted out of the
    hot path."""
    params, dims = prepare_params(w1, b1, w2, b2, compute_dtype=compute_dtype)
    return simple_mlp_padded(x, params, dims, **kwargs)


def init_params(key, inp_dim, hid_dim, out_dim, dtype=jnp.float32):
    """Synthetic init mirroring nn.Linear shapes (weights stored as [in, out])."""
    k1, k2, k3, k4 = jax.random.split(key, 4)
    bound1 = 1.0 / (inp_dim ** 0.5)
    bound2 = 1.0 / (hid_dim ** 0.5)
    w1 = jax.random.uniform(k1, (inp_dim, hid_dim), dtype, -bound1, bound1)
    b1 = jax.random.uniform(k2, (hid_dim,), dtype, -bound1, bound1)
    w2 = jax.random.uniform(k3, (hid_dim, out_dim), dtype, -bound2, bound2)
    b2 = jax.random.uniform(k4, (out_dim,), dtype, -bound2, bound2)
    return w1, b1, w2, b2


def _ref(x, w1, b1, w2, b2):
    return jnp.maximum(x @ w1 + b1, 0.0) @ w2 + b2


if __name__ == "__main__":
    key = jax.random.PRNGKey(0)

    # Case 1: module-default toy size; weight padding hoisted via prepare_params.
    kx, kp, key = jax.random.split(key, 3)
    B, inp_dim, hid_dim, out_dim = 8, 32, 64, 16
    x = jax.random.normal(kx, (B, inp_dim), jnp.float32)
    w1, b1, w2, b2 = init_params(kp, inp_dim, hid_dim, out_dim)
    params, dims = prepare_params(w1, b1, w2, b2)      # done once at "init"
    out = simple_mlp_padded(x, params, dims)
    jax.block_until_ready(out)
    assert out.shape == (B, out_dim)
    assert jnp.allclose(out, _ref(x, w1, b1, w2, b2), atol=1e-4, rtol=1e-4)

    # Case 2: non-aligned dims + multiple batch tiles (padding/tiling path;
    # 520 rows now pad to 528, not 768).
    kx2, kp2, key = jax.random.split(key, 3)
    B2, inp2, hid2, out2 = 520, 200, 300, 70
    x2 = jax.random.normal(kx2, (B2, inp2), jnp.float32)
    w1b, b1b, w2b, b2b = init_params(kp2, inp2, hid2, out2)
    out2_arr = simple_mlp(x2, w1b, b1b, w2b, b2b)
    jax.block_until_ready(out2_arr)
    assert out2_arr.shape == (B2, out2)
    assert jnp.allclose(out2_arr, _ref(x2, w1b, b1b, w2b, b2b),
                        atol=1e-4, rtol=1e-4)

    # Case 3: force hidden-dim (k) tiling to exercise the VMEM accumulator path.
    out3 = simple_mlp(x2, w1b, b1b, w2b, b2b, max_hid_tile=128)
    jax.block_until_ready(out3)
    assert jnp.allclose(out3, _ref(x2, w1b, b1b, w2b, b2b),
                        atol=1e-4, rtol=1e-4)

    # Case 4: bf16 MXU path (numerics opt-in; f32 accumulate + f32 output).
    out4 = simple_mlp(x2, w1b, b1b, w2b, b2b, compute_dtype=jnp.bfloat16)
    jax.block_until_ready(out4)
    assert out4.shape == (B2, out2) and out4.dtype == x2.dtype
    assert jnp.allclose(out4, _ref(x2, w1b, b1b, w2b, b2b),
                        atol=1.5e-1, rtol=1.5e-1)

    print("KERNEL_OK")
</pallas_src>

<mosaic_0001>
module attributes {stable_mosaic.version = 11 : i64} {
  func.func @mlp_kernel(%arg0: i32, %arg1: i32, %arg2: memref<8x128xf32, #tpu.memory_space<vmem>>, %arg3: memref<128x128xf32, #tpu.memory_space<vmem>>, %arg4: memref<1x128xf32, #tpu.memory_space<vmem>>, %arg5: memref<128x128xf32, #tpu.memory_space<vmem>>, %arg6: memref<1x128xf32, #tpu.memory_space<vmem>>, %arg7: memref<8x128xf32, #tpu.memory_space<vmem>>, %arg8: memref<8x128xf32, #tpu.memory_space<vmem>>) attributes {dimension_semantics = [#tpu.dimension_semantics<parallel>, #tpu.dimension_semantics<arbitrary>], iteration_bounds = array<i64: 1, 1>, scalar_prefetch = 0 : i64, scratch_operands = 1 : i64, tpu.core_type = #tpu.core_type<tc>, window_params = [{transform_indices = @transform_0, window_bounds = array<i64: 8, 128>}, {transform_indices = @transform_1, window_bounds = array<i64: 128, 128>}, {transform_indices = @transform_2, window_bounds = array<i64: 1, 128>}, {transform_indices = @transform_3, window_bounds = array<i64: 128, 128>}, {pipeline_mode = #tpu.pipeline_mode<synchronous>, transform_indices = @transform_4, window_bounds = array<i64: 1, 128>}, {transform_indices = @transform_5, window_bounds = array<i64: 8, 128>}]} {
    %c0_i32 = arith.constant 0 : i32
    %0 = arith.cmpi eq, %arg1, %c0_i32 : i32
    %1 = arith.extui %0 : i1 to i32
    %c0_i32_0 = arith.constant 0 : i32
    %2 = arith.cmpi ne, %1, %c0_i32_0 : i32
    scf.if %2 {
      %cst_16 = arith.constant 0.000000e+00 : f32
      %19 = vector.broadcast %cst_16 : f32 to vector<8x128xf32>
      %c0_17 = arith.constant 0 : index
      %c0_18 = arith.constant 0 : index
      %20 = vector.load %arg8[%c0_17, %c0_18] : memref<8x128xf32, #tpu.memory_space<vmem>>, vector<8x128xf32>
      tpu.vector_store %arg8[%c0_17, %c0_18], %19 {strides = array<i32>} : memref<8x128xf32, #tpu.memory_space<vmem>>, vector<8x128xf32>,
    } else {
    }
    %c0 = arith.constant 0 : index
    %c0_1 = arith.constant 0 : index
    %3 = vector.load %arg2[%c0, %c0_1] : memref<8x128xf32, #tpu.memory_space<vmem>>, vector<8x128xf32>
    %c0_2 = arith.constant 0 : index
    %c0_3 = arith.constant 0 : index
    %4 = vector.load %arg3[%c0_2, %c0_3] : memref<128x128xf32, #tpu.memory_space<vmem>>, vector<128x128xf32>
    %cst = arith.constant dense<0.000000e+00> : vector<8x128xf32>
    %5 = tpu.matmul %3, %4, %cst {dimension_numbers = #tpu.dot_dimension_numbers<[1], [0], [0], [1], [0, 0, 1, 1], [], []>} : vector<8x128xf32>, vector<128x128xf32>, vector<8x128xf32> -> vector<8x128xf32>
    %c0_4 = arith.constant 0 : index
    %c0_5 = arith.constant 0 : index
    %6 = vector.load %arg4[%c0_4, %c0_5] : memref<1x128xf32, #tpu.memory_space<vmem>>, vector<1x128xf32>
    %7 = vector.broadcast %6 : vector<1x128xf32> to vector<8x128xf32>
    %8 = arith.addf %5, %7 : vector<8x128xf32>
    %cst_6 = arith.constant 0.000000e+00 : f32
    %9 = vector.broadcast %cst_6 : f32 to vector<8x128xf32>
    %10 = arith.maximumf %8, %9 : vector<8x128xf32>
    %c0_7 = arith.constant 0 : index
    %c0_8 = arith.constant 0 : index
    %11 = vector.load %arg8[%c0_7, %c0_8] : memref<8x128xf32, #tpu.memory_space<vmem>>, vector<8x128xf32>
    %c0_9 = arith.constant 0 : index
    %c0_10 = arith.constant 0 : index
    %12 = vector.load %arg5[%c0_9, %c0_10] : memref<128x128xf32, #tpu.memory_space<vmem>>, vector<128x128xf32>
    %cst_11 = arith.constant dense<0.000000e+00> : vector<8x128xf32>
    %13 = tpu.matmul %10, %12, %cst_11 {dimension_numbers = #tpu.dot_dimension_numbers<[1], [0], [0], [1], [0, 0, 1, 1], [], []>} : vector<8x128xf32>, vector<128x128xf32>, vector<8x128xf32> -> vector<8x128xf32>
    %14 = arith.addf %11, %13 : vector<8x128xf32>
    %c0_12 = arith.constant 0 : index
    %c0_13 = arith.constant 0 : index
    %15 = vector.load %arg8[%c0_12, %c0_13] : memref<8x128xf32, #tpu.memory_space<vmem>>, vector<8x128xf32>
    tpu.vector_store %arg8[%c0_12, %c0_13], %14 {strides = array<i32>} : memref<8x128xf32, #tpu.memory_space<vmem>>, vector<8x128xf32>,
    %c0_i32_14 = arith.constant 0 : i32
    %16 = arith.cmpi eq, %arg1, %c0_i32_14 : i32
    %17 = arith.extui %16 : i1 to i32
    %c0_i32_15 = arith.constant 0 : i32
    %18 = arith.cmpi ne, %17, %c0_i32_15 : i32
    scf.if %18 {
      %c0_16 = arith.constant 0 : index
      %c0_17 = arith.constant 0 : index
      %19 = vector.load %arg8[%c0_16, %c0_17] : memref<8x128xf32, #tpu.memory_space<vmem>>, vector<8x128xf32>
      %c0_18 = arith.constant 0 : index
      %c0_19 = arith.constant 0 : index
      %20 = vector.load %arg6[%c0_18, %c0_19] : memref<1x128xf32, #tpu.memory_space<vmem>>, vector<1x128xf32>
      %21 = vector.broadcast %20 : vector<1x128xf32> to vector<8x128xf32>
      %22 = arith.addf %19, %21 : vector<8x128xf32>
      %c0_20 = arith.constant 0 : index
      %c0_21 = arith.constant 0 : index
      %23 = vector.load %arg7[%c0_20, %c0_21] : memref<8x128xf32, #tpu.memory_space<vmem>>, vector<8x128xf32>
      tpu.vector_store %arg7[%c0_20, %c0_21], %22 {strides = array<i32>} : memref<8x128xf32, #tpu.memory_space<vmem>>, vector<8x128xf32>,
    } else {
    }
    return
  }
  func.func @transform_0(%arg0: i32, %arg1: i32) -> (i32, i32) {
    %c0_i32 = arith.constant 0 : i32
    %c0_i32_0 = arith.constant 0 : i32
    return %arg0, %c0_i32 : i32, i32
  }
  func.func @transform_1(%arg0: i32, %arg1: i32) -> (i32, i32) {
    %c0_i32 = arith.constant 0 : i32
    %c0_i32_0 = arith.constant 0 : i32
    return %c0_i32, %arg1 : i32, i32
  }
  func.func @transform_2(%arg0: i32, %arg1: i32) -> (i32, i32) {
    %c0_i32 = arith.constant 0 : i32
    %c0_i32_0 = arith.constant 0 : i32
    return %c0_i32, %arg1 : i32, i32
  }
  func.func @transform_3(%arg0: i32, %arg1: i32) -> (i32, i32) {
    %c0_i32 = arith.constant 0 : i32
    %c0_i32_0 = arith.constant 0 : i32
    return %arg1, %c0_i32 : i32, i32
  }
  func.func @transform_4(%arg0: i32, %arg1: i32) -> (i32, i32) {
    %c0_i32 = arith.constant 0 : i32
    %c0_i32_0 = arith.constant 0 : i32
    %c0_i32_1 = arith.constant 0 : i32
    return %c0_i32, %c0_i32_0 : i32, i32
  }
  func.func @transform_5(%arg0: i32, %arg1: i32) -> (i32, i32) {
    %c0_i32 = arith.constant 0 : i32
    %c0_i32_0 = arith.constant 0 : i32
    return %arg0, %c0_i32 : i32, i32
  }
}

</mosaic_0001>

<llo_original>
// kernel: tpu_custom_call.1
$region0: #{tpu_custom_call.1}
  #allocation0 [shape = 'u32[]', space=smem, size = 0x4, offset = 0x4, fixed_abs, tag = 'smem constant byte address 0x4 - core index']
  #allocation1 [shape = 'u32[72,128]{1,0:T(1,128)}', space=vmem, size = 0x9000, scoped, tag = 'internal scratch']
  #allocation2 [shape = 'f32[8,128]{1,0:T(8,128)}', space=vmem, size = 0x1000, scoped, tag = 'scratch operand']
  %s0 = inlined_call_operand.hbm [shape: f32[8,128], index: 0, kind: input, shape index: {}]
  %s1 = inlined_call_operand.hbm [shape: f32[128,128], index: 1, kind: input, shape index: {}]
  %s2 = inlined_call_operand.vmem [shape: f32[1,128], index: 2, kind: input, shape index: {}]
  %s3 = inlined_call_operand.hbm [shape: f32[128,128], index: 3, kind: input, shape index: {}]
  %s4 = inlined_call_operand.vmem [shape: f32[1,128], index: 4, kind: input, shape index: {}]
  %s5 = inlined_call_operand.hbm [shape: f32[8,128], index: 5, kind: output, shape index: {}]
  %s6 = sld [smem:[#allocation0]]
  $region50: #{tpu_custom_call.1} parent=0
    _
  %s8 = ssub.s32 1, %s6
  %s9 = scalar_select 0, %s8, %s6
  $region1: #{tpu_custom_call.1} parent=0
    #allocation3 [shape = 'u8[4096]{0}', space=vmem, size = 0x1000, scoped, tag = 'input window, operand 0, single buffered']
    #allocation4 [shape = 's32[1]{0}', space=sflag, size = 0x4, scoped, tag = 'scoped memory for tpu_custom_call.1']
    #allocation5 [shape = 's32[1]{0}', space=sflag, size = 0x4, scoped, tag = 'scoped memory for tpu_custom_call.1']
    #allocation6 [shape = 'u8[65536]{0}', space=vmem, size = 0x10000, scoped, tag = 'input window, operand 1, single buffered']
    #allocation7 [shape = 's32[1]{0}', space=sflag, size = 0x4, scoped, tag = 'scoped memory for tpu_custom_call.1']
    #allocation8 [shape = 'u8[65536]{0}', space=vmem, size = 0x10000, scoped, tag = 'input window, operand 3, single buffered']
    #allocation9 [shape = 'u8[4096]{0}', space=vmem, size = 0x1000, scoped, tag = 'output window, operand 0, single buffered']
    %10 = vsyncpa [#allocation4], 0
    %11 = vsyncpa [#allocation7], 0
    %12 = vsyncpa [#allocation5], 0
    // Predicated region
    $region2: #{tpu_custom_call.1} parent=1 // pred_check
      _
    $region3: #{tpu_custom_call.1} parent=1 // pred_check_branch
      %14 = sbr.rel (0) target = $region5
    $region4: #{tpu_custom_call.1} parent=1 // pred_region
      %16 = vsyncadd [#allocation4], 0
      %s18 = sshll.u32 %s0, 4
      %s19 = int_to_ptr.hbm [resolvable:$true] %s18
      %s20 = sshll.u32 [#allocation3], 4
      %s21 = int_to_ptr.vmem [resolvable:$true] %s20
      %23 = dma.hbm_to_vmem [thread:$0]  %s19, 128, %s21, [#allocation4]
    $region5: #{tpu_custom_call.1} parent=1 // pred_fallthru
      _
    // Predicated region
    $region6: #{tpu_custom_call.1} parent=1 // pred_check
      _
    $region7: #{tpu_custom_call.1} parent=1 // pred_check_branch
      %25 = sbr.rel (0) target = $region9
    $region8: #{tpu_custom_call.1} parent=1 // pred_region
      %27 = vsyncadd [#allocation7], 0
      %s28 = sshll.u32 %s1, 4
      %s29 = int_to_ptr.hbm [resolvable:$true] %s28
      %s30 = sshll.u32 [#allocation6], 4
      %s31 = int_to_ptr.vmem [resolvable:$true] %s30
      %36 = dma.hbm_to_vmem [thread:$0]  %s29, 2048, %s31, [#allocation7], 128, 128, 8
    $region9: #{tpu_custom_call.1} parent=1 // pred_fallthru
      _
    // Predicated region
    $region10: #{tpu_custom_call.1} parent=1 // pred_check
      _
    $region11: #{tpu_custom_call.1} parent=1 // pred_check_branch
      %38 = sbr.rel (0) target = $region13
    $region12: #{tpu_custom_call.1} parent=1 // pred_region
      _
    $region13: #{tpu_custom_call.1} parent=1 // pred_fallthru
      _
    // Predicated region
    $region14: #{tpu_custom_call.1} parent=1 // pred_check
      _
    $region15: #{tpu_custom_call.1} parent=1 // pred_check_branch
      %40 = sbr.rel (0) target = $region17
    $region16: #{tpu_custom_call.1} parent=1 // pred_region
      %42 = vsyncadd [#allocation7], 0
      %s43 = sshll.u32 %s3, 4
      %s44 = int_to_ptr.hbm [resolvable:$true] %s43
      %s45 = sshll.u32 [#allocation8], 4
      %s46 = int_to_ptr.vmem [resolvable:$true] %s45
      %51 = dma.hbm_to_vmem [thread:$0]  %s44, 2048, %s46, [#allocation7], 128, 128, 8
    $region17: #{tpu_custom_call.1} parent=1 // pred_fallthru
      _
    // Predicated region
    $region18: #{tpu_custom_call.1} parent=1 // pred_check
      _
    $region19: #{tpu_custom_call.1} parent=1 // pred_check_branch
      %53 = sbr.rel (0) target = $region21
    $region20: #{tpu_custom_call.1} parent=1 // pred_region
      _
    $region21: #{tpu_custom_call.1} parent=1 // pred_fallthru
      _
    // Predicated region
    $region22: #{tpu_custom_call.1} parent=1 // pred_check
      _
    $region23: #{tpu_custom_call.1} parent=1 // pred_check_branch
      %55 = sbr.rel (0) target = $region25
    $region24: #{tpu_custom_call.1} parent=1 // pred_region
      %57 = dma.done [#allocation4], 128
    $region25: #{tpu_custom_call.1} parent=1 // pred_fallthru
      _
    // Predicated region
    $region26: #{tpu_custom_call.1} parent=1 // pred_check
      _
    $region27: #{tpu_custom_call.1} parent=1 // pred_check_branch
      %59 = sbr.rel (0) target = $region29
    $region28: #{tpu_custom_call.1} parent=1 // pred_region
      %61 = dma.done [#allocation7], 2048
    $region29: #{tpu_custom_call.1} parent=1 // pred_fallthru
      _
    // Predicated region
    $region30: #{tpu_custom_call.1} parent=1 // pred_check
      _
    $region31: #{tpu_custom_call.1} parent=1 // pred_check_branch
      %63 = sbr.rel (0) target = $region33
    $region32: #{tpu_custom_call.1} parent=1 // pred_region
      %65 = dma.done [#allocation7], 2048
    $region33: #{tpu_custom_call.1} parent=1 // pred_fallthru
      _
    %p66 = scmp.eq.s32.totalorder 0, 0
    // Predicated region
    $region34: #{tpu_custom_call.1} parent=1 // pred_check
      %p67 = pneg %p66
    $region35: #{tpu_custom_call.1} parent=1 // pred_check_branch
      %69 = sbr.rel (%p67) target = $region37
    $region36: #{tpu_custom_call.1} parent=1 // pred_region
      %70 = vst [vmem:[#allocation2] sm:$0xff] 0.0
    $region37: #{tpu_custom_call.1} parent=1 // pred_fallthru
      _
    %v71 = vld [vmem:[#allocation3] sm:$0xff]
    %v72 = vld [vmem:[#allocation6] sm:$0xff]
    %v73 = vld [vmem:[#allocation6 + $0x8] sm:$0xff]
    %v74 = vld [vmem:[#allocation6 + $0x10] sm:$0xff]
    %v75 = vld [vmem:[#allocation6 + $0x18] sm:$0xff]
    %v76 = vld [vmem:[#allocation6 + $0x20] sm:$0xff]
    %v77 = vld [vmem:[#allocation6 + $0x28] sm:$0xff]
    %v78 = vld [vmem:[#allocation6 + $0x30] sm:$0xff]
    %v79 = vld [vmem:[#allocation6 + $0x38] sm:$0xff]
    %v80 = vld [vmem:[#allocation6 + $0x40] sm:$0xff]
    %v81 = vld [vmem:[#allocation6 + $0x48] sm:$0xff]
    %v82 = vld [vmem:[#allocation6 + $0x50] sm:$0xff]
    %v83 = vld [vmem:[#allocation6 + $0x58] sm:$0xff]
    %v84 = vld [vmem:[#allocation6 + $0x60] sm:$0xff]
    %v85 = vld [vmem:[#allocation6 + $0x68] sm:$0xff]
    %v86 = vld [vmem:[#allocation6 + $0x70] sm:$0xff]
    %v87 = vld [vmem:[#allocation6 + $0x78] sm:$0xff]
    %v88 = vld [vmem:[%s2] sm:$0x1]
    %v90 = vperm.slane %v88, 0
    %92 = vmatpush.msra.mxu0 %v87
    %93 = vmatpush.msra.mxu0 %v86
    %94 = vmatpush.msra.mxu0 %v85
    %95 = vmatpush.msra.mxu0 %v84
    %96 = vmatpush.msra.mxu0 %v83
    %97 = vmatpush.msra.mxu0 %v82
    %98 = vmatpush.msra.mxu0 %v81
    %99 = vmatpush.msra.mxu0 %v80
    %100 = vmatpush.msra.mxu0 %v79
    %101 = vmatpush.msra.mxu0 %v78
    %102 = vmatpush.msra.mxu0 %v77
    %103 = vmatpush.msra.mxu0 %v76
    %104 = vmatpush.msra.mxu0 %v75
    %105 = vmatpush.msra.mxu0 %v74
    %106 = vmatpush.msra.mxu0 %v73
    %107 = vmatpush.msra.mxu0 %v72
    %108 = vmatmul.f32.gmra.mxu0 %v71
    %v109 = vpop.f32.mrf.mxu0
    %v110 = vadd.f32 %v90, %v109
    %111 = vdwg.mxu0
    %v112 = vmax.f32 %v110, 0.0
    %v113 = vld [vmem:[#allocation2] sm:$0xff]
    %v114 = vld [vmem:[#allocation8] sm:$0xff]
    %v115 = vld [vmem:[#allocation8 + $0x8] sm:$0xff]
    %v116 = vld [vmem:[#allocation8 + $0x10] sm:$0xff]
    %v117 = vld [vmem:[#allocation8 + $0x18] sm:$0xff]
    %v118 = vld [vmem:[#allocation8 + $0x20] sm:$0xff]
    %v119 = vld [vmem:[#allocation8 + $0x28] sm:$0xff]
    %v120 = vld [vmem:[#allocation8 + $0x30] sm:$0xff]
    %v121 = vld [vmem:[#allocation8 + $0x38] sm:$0xff]
    %v122 = vld [vmem:[#allocation8 + $0x40] sm:$0xff]
    %v123 = vld [vmem:[#allocation8 + $0x48] sm:$0xff]
    %v124 = vld [vmem:[#allocation8 + $0x50] sm:$0xff]
    %v125 = vld [vmem:[#allocation8 + $0x58] sm:$0xff]
    %v126 = vld [vmem:[#allocation8 + $0x60] sm:$0xff]
    %v127 = vld [vmem:[#allocation8 + $0x68] sm:$0xff]
    %v128 = vld [vmem:[#allocation8 + $0x70] sm:$0xff]
    %v129 = vld [vmem:[#allocation8 + $0x78] sm:$0xff]
    %130 = vmatpush.msra.mxu0 %v129
    %131 = vmatpush.msra.mxu0 %v128
    %132 = vmatpush.msra.mxu0 %v127
    %133 = vmatpush.msra.mxu0 %v126
    %134 = vmatpush.msra.mxu0 %v125
    %135 = vmatpush.msra.mxu0 %v124
    %136 = vmatpush.msra.mxu0 %v123
    %137 = vmatpush.msra.mxu0 %v122
    %138 = vmatpush.msra.mxu0 %v121
    %139 = vmatpush.msra.mxu0 %v120
    %140 = vmatpush.msra.mxu0 %v119
    %141 = vmatpush.msra.mxu0 %v118
    %142 = vmatpush.msra.mxu0 %v117
    %143 = vmatpush.msra.mxu0 %v116
    %144 = vmatpush.msra.mxu0 %v115
    %145 = vmatpush.msra.mxu0 %v114
    %146 = vmatmul.f32.gmra.mxu0 %v112
    %v147 = vpop.f32.mrf.mxu0
    %v148 = vadd.f32 0.0, %v147
    %149 = vdwg.mxu0
    %v150 = vadd.f32 %v113, %v148
    %151 = vst [vmem:[#allocation2] sm:$0xff] %v150
    // Predicated region
    $region38: #{tpu_custom_call.1} parent=1 // pred_check
      %p152 = pneg %p66
    $region39: #{tpu_custom_call.1} parent=1 // pred_check_branch
      %154 = sbr.rel (%p152) target = $region41
    $region40: #{tpu_custom_call.1} parent=1 // pred_region
      %v155 = vld [vmem:[#allocation2] sm:$0xff]
      %v156 = vld [vmem:[%s4] sm:$0x1]
      %v158 = vperm.slane %v156, 0
      %v160 = vadd.f32 %v155, %v158
      %161 = vst [vmem:[#allocation9] sm:$0xff] %v160
    $region41: #{tpu_custom_call.1} parent=1 // pred_fallthru
      _
    // Predicated region
    $region42: #{tpu_custom_call.1} parent=1 // pred_check
      _
    $region43: #{tpu_custom_call.1} parent=1 // pred_check_branch
      %163 = sbr.rel (0) target = $region45
    $region44: #{tpu_custom_call.1} parent=1 // pred_region
      %165 = vsyncadd [#allocation5], 0
      %s167 = sshll.u32 [#allocation9], 4
      %s168 = int_to_ptr.vmem [resolvable:$true] %s167
      %s169 = sshll.u32 %s5, 4
      %s170 = int_to_ptr.hbm [resolvable:$true] %s169
      %172 = dma.vmem_to_hbm [thread:$0]  %s168, 128, %s170, [#allocation5]
    $region45: #{tpu_custom_call.1} parent=1 // pred_fallthru
      _
    // Predicated region
    $region46: #{tpu_custom_call.1} parent=1 // pred_check
      _
    $region47: #{tpu_custom_call.1} parent=1 // pred_check_branch
      %174 = sbr.rel (0) target = $region49
    $region48: #{tpu_custom_call.1} parent=1 // pred_region
      %176 = dma.done [#allocation5], 128
    $region49: #{tpu_custom_call.1} parent=1 // pred_fallthru
      _
    %177 = vsyncpa [#allocation4], 1
    %178 = vsyncpa [#allocation7], 1
    %179 = vsyncpa [#allocation5], 1

</llo_original>
